<compile_context>
chip_gen: v7x
topology: tpu7x:2x2x1
jax: 0.10.0
libtpu: 0.0.40
codegen_flags: <defaults>
</compile_context>

<pallas_src>
import jax
import jax.numpy as jnp
from jax.experimental import pallas as pl
from jax.experimental.pallas import tpu as pltpu

MODEL_DIM = 128
FFN_DIM = 512
LN_EPS = 1e-5


def _round_up(n, m):
    return (n + m - 1) // m * m


def ffn_kernel(x_ref, w1_ref, b1_ref, w2_ref, b2_ref, gamma_ref, beta_ref, o_ref):
    # Hoist the small grid-invariant operands once.
    b1 = b1_ref[...]          # (1, F) f32
    b2 = b2_ref[...]          # (1, D) f32
    gamma = gamma_ref[...]    # (1, D) f32
    beta = beta_ref[...]      # (1, D) f32

    x = x_ref[...].astype(jnp.float32)                        # (tm, D) f32 (residual/LN path)

    # Position-wise FFN: relu(x @ W1^T + b1) @ W2^T + b2
    # bf16 operands -> MXU fast path; f32 accumulation via preferred_element_type.
    h = jnp.dot(x.astype(jnp.bfloat16), w1_ref[...],
                preferred_element_type=jnp.float32) + b1
    h = jnp.maximum(h, 0.0)                                   # (tm, F) f32, stays fused
    y = jnp.dot(h.astype(jnp.bfloat16), w2_ref[...],
                preferred_element_type=jnp.float32) + b2      # (tm, D) f32

    # dropout(p=0.0) is identity; residual add in f32.
    z = x + y

    # LayerNorm over model_dim (biased variance, matching torch.nn.LayerNorm).
    mean = jnp.mean(z, axis=-1, keepdims=True)
    zc = z - mean
    var = jnp.mean(zc * zc, axis=-1, keepdims=True)
    normed = zc * jax.lax.rsqrt(var + LN_EPS)
    o_ref[...] = (normed * gamma + beta).astype(o_ref.dtype)


def positional_wise_ffn(x, w1, b1, w2, b2, gamma, beta, *, tm=256):
    """x: (B, S, model_dim). w1: (model_dim, ffn_dim) [already transposed],
    b1: (ffn_dim,), w2: (ffn_dim, model_dim), b2: (model_dim,), gamma/beta: (model_dim,)."""
    B, S, D = x.shape
    F = w1.shape[1]
    rows = B * S

    # Sublane-aligned tile; cap so the grid keeps >= 2 steps whenever possible
    # (megacore on v7x) and padding overhead stays bounded for tiny inputs.
    tm = max(8, min(tm, _round_up(max(rows // 2, 1), 8)))
    rows_p = _round_up(rows, tm)

    x2d = x.reshape(rows, D)
    if rows_p != rows:
        x2d = jnp.pad(x2d, ((0, rows_p - rows), (0, 0)))

    # Weights pre-cast to bf16 for the MXU; small per-lane vectors stay f32.
    w1_bf = w1.astype(jnp.bfloat16)
    w2_bf = w2.astype(jnp.bfloat16)
    b1_2d = b1.reshape(1, F).astype(jnp.float32)
    b2_2d = b2.reshape(1, D).astype(jnp.float32)
    gamma_2d = gamma.reshape(1, D).astype(jnp.float32)
    beta_2d = beta.reshape(1, D).astype(jnp.float32)

    out2d = pl.pallas_call(
        ffn_kernel,
        out_shape=jax.ShapeDtypeStruct((rows_p, D), x.dtype),
        grid_spec=pltpu.PrefetchScalarGridSpec(
            num_scalar_prefetch=0,
            grid=(rows_p // tm,),
            in_specs=[
                pl.BlockSpec((tm, D), lambda i: (i, 0)),   # x tile
                pl.BlockSpec((D, F), lambda i: (0, 0)),    # W1^T (bf16, grid-invariant)
                pl.BlockSpec((1, F), lambda i: (0, 0)),    # b1
                pl.BlockSpec((F, D), lambda i: (0, 0)),    # W2^T (bf16, grid-invariant)
                pl.BlockSpec((1, D), lambda i: (0, 0)),    # b2
                pl.BlockSpec((1, D), lambda i: (0, 0)),    # gamma
                pl.BlockSpec((1, D), lambda i: (0, 0)),    # beta
            ],
            out_specs=pl.BlockSpec((tm, D), lambda i: (i, 0)),
        ),
        compiler_params=pltpu.CompilerParams(
            dimension_semantics=("parallel",),
            vmem_limit_bytes=32 * 1024 * 1024,
        ),
    )(x2d, w1_bf, b1_2d, w2_bf, b2_2d, gamma_2d, beta_2d)

    return out2d[:rows].reshape(B, S, D)


def reference(x, w1, b1, w2, b2, gamma, beta):
    # Pure f32 reference matching the PyTorch module's math.
    h = jnp.maximum(jnp.einsum("bsd,df->bsf", x, w1) + b1, 0.0)
    y = jnp.einsum("bsf,fd->bsd", h, w2) + b2
    z = x + y
    mean = jnp.mean(z, axis=-1, keepdims=True)
    var = jnp.mean((z - mean) ** 2, axis=-1, keepdims=True)
    return (z - mean) * jax.lax.rsqrt(var + LN_EPS) * gamma + beta


if __name__ == "__main__":
    key = jax.random.PRNGKey(0)
    kx, k1, kb1, k2, kb2, kg, kb = jax.random.split(key, 7)

    B, S = 2, 8
    x = jax.random.normal(kx, (B, S, MODEL_DIM), dtype=jnp.float32)

    # Conv1d weights are (out_ch, in_ch, 1); store the per-position-linear
    # equivalents already transposed for row-major matmul: W1^T (D, F), W2^T (F, D).
    w1 = jax.random.normal(k1, (MODEL_DIM, FFN_DIM), dtype=jnp.float32) * 0.05
    b1 = jax.random.normal(kb1, (FFN_DIM,), dtype=jnp.float32) * 0.05
    w2 = jax.random.normal(k2, (FFN_DIM, MODEL_DIM), dtype=jnp.float32) * 0.05
    b2 = jax.random.normal(kb2, (MODEL_DIM,), dtype=jnp.float32) * 0.05
    gamma = 1.0 + 0.1 * jax.random.normal(kg, (MODEL_DIM,), dtype=jnp.float32)
    beta = 0.1 * jax.random.normal(kb, (MODEL_DIM,), dtype=jnp.float32)

    out = positional_wise_ffn(x, w1, b1, w2, b2, gamma, beta)
    out = jax.block_until_ready(out)

    ref = reference(x, w1, b1, w2, b2, gamma, beta)
    assert out.shape == (B, S, MODEL_DIM)
    # Tolerance accounts for bf16 matmul operands (f32 accumulation); the
    # residual + LayerNorm epilogue is exact f32.
    assert jnp.allclose(out, ref, atol=3e-2, rtol=3e-2), "mismatch vs reference"

    print("KERNEL_OK")
</pallas_src>

<mosaic_0001>
module attributes {stable_mosaic.version = 11 : i64} {
  func.func @ffn_kernel(%arg0: i32, %arg1: memref<8x128xf32, #tpu.memory_space<vmem>>, %arg2: memref<128x512xbf16, #tpu.memory_space<vmem>>, %arg3: memref<1x512xf32, #tpu.memory_space<vmem>>, %arg4: memref<512x128xbf16, #tpu.memory_space<vmem>>, %arg5: memref<1x128xf32, #tpu.memory_space<vmem>>, %arg6: memref<1x128xf32, #tpu.memory_space<vmem>>, %arg7: memref<1x128xf32, #tpu.memory_space<vmem>>, %arg8: memref<8x128xf32, #tpu.memory_space<vmem>>) attributes {dimension_semantics = [#tpu.dimension_semantics<parallel>], iteration_bounds = array<i64: 2>, scalar_prefetch = 0 : i64, scratch_operands = 0 : i64, tpu.core_type = #tpu.core_type<tc>, window_params = [{transform_indices = @transform_0, window_bounds = array<i64: 8, 128>}, {pipeline_mode = #tpu.pipeline_mode<synchronous>, transform_indices = @transform_1, window_bounds = array<i64: 128, 512>}, {pipeline_mode = #tpu.pipeline_mode<synchronous>, transform_indices = @transform_2, window_bounds = array<i64: 1, 512>}, {pipeline_mode = #tpu.pipeline_mode<synchronous>, transform_indices = @transform_3, window_bounds = array<i64: 512, 128>}, {pipeline_mode = #tpu.pipeline_mode<synchronous>, transform_indices = @transform_4, window_bounds = array<i64: 1, 128>}, {pipeline_mode = #tpu.pipeline_mode<synchronous>, transform_indices = @transform_5, window_bounds = array<i64: 1, 128>}, {pipeline_mode = #tpu.pipeline_mode<synchronous>, transform_indices = @transform_6, window_bounds = array<i64: 1, 128>}, {transform_indices = @transform_7, window_bounds = array<i64: 8, 128>}]} {
    %c0 = arith.constant 0 : index
    %c0_0 = arith.constant 0 : index
    %0 = vector.load %arg3[%c0, %c0_0] : memref<1x512xf32, #tpu.memory_space<vmem>>, vector<1x512xf32>
    %c0_1 = arith.constant 0 : index
    %c0_2 = arith.constant 0 : index
    %1 = vector.load %arg5[%c0_1, %c0_2] : memref<1x128xf32, #tpu.memory_space<vmem>>, vector<1x128xf32>
    %c0_3 = arith.constant 0 : index
    %c0_4 = arith.constant 0 : index
    %2 = vector.load %arg6[%c0_3, %c0_4] : memref<1x128xf32, #tpu.memory_space<vmem>>, vector<1x128xf32>
    %c0_5 = arith.constant 0 : index
    %c0_6 = arith.constant 0 : index
    %3 = vector.load %arg7[%c0_5, %c0_6] : memref<1x128xf32, #tpu.memory_space<vmem>>, vector<1x128xf32>
    %c0_7 = arith.constant 0 : index
    %c0_8 = arith.constant 0 : index
    %4 = vector.load %arg1[%c0_7, %c0_8] : memref<8x128xf32, #tpu.memory_space<vmem>>, vector<8x128xf32>
    %5 = arith.truncf %4 : vector<8x128xf32> to vector<8x128xbf16>
    %c0_9 = arith.constant 0 : index
    %c0_10 = arith.constant 0 : index
    %6 = vector.load %arg2[%c0_9, %c0_10] : memref<128x512xbf16, #tpu.memory_space<vmem>>, vector<128x512xbf16>
    %cst = arith.constant dense<0.000000e+00> : vector<8x512xf32>
    %7 = tpu.matmul %5, %6, %cst {dimension_numbers = #tpu.dot_dimension_numbers<[1], [0], [0], [1], [0, 0, 1, 1], [], []>} : vector<8x128xbf16>, vector<128x512xbf16>, vector<8x512xf32> -> vector<8x512xf32>
    %8 = vector.broadcast %0 : vector<1x512xf32> to vector<8x512xf32>
    %9 = arith.addf %7, %8 : vector<8x512xf32>
    %cst_11 = arith.constant 0.000000e+00 : f32
    %10 = vector.broadcast %cst_11 : f32 to vector<8x512xf32>
    %11 = arith.maximumf %9, %10 : vector<8x512xf32>
    %12 = arith.truncf %11 : vector<8x512xf32> to vector<8x512xbf16>
    %c0_12 = arith.constant 0 : index
    %c0_13 = arith.constant 0 : index
    %13 = vector.load %arg4[%c0_12, %c0_13] : memref<512x128xbf16, #tpu.memory_space<vmem>>, vector<512x128xbf16>
    %cst_14 = arith.constant dense<0.000000e+00> : vector<8x128xf32>
    %14 = tpu.matmul %12, %13, %cst_14 {dimension_numbers = #tpu.dot_dimension_numbers<[1], [0], [0], [1], [0, 0, 1, 1], [], []>} : vector<8x512xbf16>, vector<512x128xbf16>, vector<8x128xf32> -> vector<8x128xf32>
    %15 = vector.broadcast %1 : vector<1x128xf32> to vector<8x128xf32>
    %16 = arith.addf %14, %15 : vector<8x128xf32>
    %17 = arith.addf %4, %16 : vector<8x128xf32>
    %cst_15 = arith.constant dense<0.000000e+00> : vector<8xf32>
    %18 = vector.multi_reduction <add>, %17, %cst_15 [1] : vector<8x128xf32> to vector<8xf32>
    %19 = vector.shape_cast %18 : vector<8xf32> to vector<8x1xf32>
    %cst_16 = arith.constant 1.280000e+02 : f32
    %20 = vector.broadcast %cst_16 : f32 to vector<8x1xf32>
    %21 = arith.divf %19, %20 : vector<8x1xf32>
    %22 = vector.broadcast %21 : vector<8x1xf32> to vector<8x128xf32>
    %23 = arith.subf %17, %22 : vector<8x128xf32>
    %24 = arith.mulf %23, %23 : vector<8x128xf32>
    %cst_17 = arith.constant dense<0.000000e+00> : vector<8xf32>
    %25 = vector.multi_reduction <add>, %24, %cst_17 [1] : vector<8x128xf32> to vector<8xf32>
    %26 = vector.shape_cast %25 : vector<8xf32> to vector<8x1xf32>
    %cst_18 = arith.constant 1.280000e+02 : f32
    %27 = vector.broadcast %cst_18 : f32 to vector<8x1xf32>
    %28 = arith.divf %26, %27 : vector<8x1xf32>
    %cst_19 = arith.constant 9.99999974E-6 : f32
    %29 = vector.broadcast %cst_19 : f32 to vector<8x1xf32>
    %30 = arith.addf %28, %29 : vector<8x1xf32>
    %31 = math.rsqrt %30 : vector<8x1xf32>
    %32 = vector.broadcast %31 : vector<8x1xf32> to vector<8x128xf32>
    %33 = arith.mulf %23, %32 : vector<8x128xf32>
    %34 = vector.broadcast %2 : vector<1x128xf32> to vector<8x128xf32>
    %35 = arith.mulf %33, %34 : vector<8x128xf32>
    %36 = vector.broadcast %3 : vector<1x128xf32> to vector<8x128xf32>
    %37 = arith.addf %35, %36 : vector<8x128xf32>
    %c0_20 = arith.constant 0 : index
    %c0_21 = arith.constant 0 : index
    %38 = vector.load %arg8[%c0_20, %c0_21] : memref<8x128xf32, #tpu.memory_space<vmem>>, vector<8x128xf32>
    tpu.vector_store %arg8[%c0_20, %c0_21], %37 {strides = array<i32>} : memref<8x128xf32, #tpu.memory_space<vmem>>, vector<8x128xf32>,
    return
  }
  func.func @transform_0(%arg0: i32) -> (i32, i32) {
    %c0_i32 = arith.constant 0 : i32
    %c0_i32_0 = arith.constant 0 : i32
    return %arg0, %c0_i32 : i32, i32
  }
  func.func @transform_1(%arg0: i32) -> (i32, i32) {
    %c0_i32 = arith.constant 0 : i32
    %c0_i32_0 = arith.constant 0 : i32
    %c0_i32_1 = arith.constant 0 : i32
    return %c0_i32, %c0_i32_0 : i32, i32
  }
  func.func @transform_2(%arg0: i32) -> (i32, i32) {
    %c0_i32 = arith.constant 0 : i32
    %c0_i32_0 = arith.constant 0 : i32
    %c0_i32_1 = arith.constant 0 : i32
    return %c0_i32, %c0_i32_0 : i32, i32
  }
  func.func @transform_3(%arg0: i32) -> (i32, i32) {
    %c0_i32 = arith.constant 0 : i32
    %c0_i32_0 = arith.constant 0 : i32
    %c0_i32_1 = arith.constant 0 : i32
    return %c0_i32, %c0_i32_0 : i32, i32
  }
  func.func @transform_4(%arg0: i32) -> (i32, i32) {
    %c0_i32 = arith.constant 0 : i32
    %c0_i32_0 = arith.constant 0 : i32
    %c0_i32_1 = arith.constant 0 : i32
    return %c0_i32, %c0_i32_0 : i32, i32
  }
  func.func @transform_5(%arg0: i32) -> (i32, i32) {
    %c0_i32 = arith.constant 0 : i32
    %c0_i32_0 = arith.constant 0 : i32
    %c0_i32_1 = arith.constant 0 : i32
    return %c0_i32, %c0_i32_0 : i32, i32
  }
  func.func @transform_6(%arg0: i32) -> (i32, i32) {
    %c0_i32 = arith.constant 0 : i32
    %c0_i32_0 = arith.constant 0 : i32
    %c0_i32_1 = arith.constant 0 : i32
    return %c0_i32, %c0_i32_0 : i32, i32
  }
  func.func @transform_7(%arg0: i32) -> (i32, i32) {
    %c0_i32 = arith.constant 0 : i32
    %c0_i32_0 = arith.constant 0 : i32
    return %arg0, %c0_i32 : i32, i32
  }
}

</mosaic_0001>

<llo_original>
// kernel: tpu_custom_call.1
$region0: #{tpu_custom_call.1}
  #allocation0 [shape = 'u32[]', space=smem, size = 0x4, offset = 0x4, fixed_abs, tag = 'smem constant byte address 0x4 - core index']
  #allocation1 [shape = 'u32[144,128]{1,0:T(1,128)}', space=vmem, size = 0x12000, scoped, tag = 'internal scratch']
  %s0 = inlined_call_operand.hbm [shape: f32[16,128], index: 0, kind: input, shape index: {}]
  %s1 = inlined_call_operand.hbm [shape: bf16[128,512], index: 1, kind: input, shape index: {}]
  %s2 = inlined_call_operand.vmem [shape: f32[1,512], index: 2, kind: input, shape index: {}]
  %s3 = inlined_call_operand.hbm [shape: bf16[512,128], index: 3, kind: input, shape index: {}]
  %s4 = inlined_call_operand.vmem [shape: f32[1,128], index: 4, kind: input, shape index: {}]
  %s5 = inlined_call_operand.vmem [shape: f32[1,128], index: 5, kind: input, shape index: {}]
  %s6 = inlined_call_operand.vmem [shape: f32[1,128], index: 6, kind: input, shape index: {}]
  %s7 = inlined_call_operand.hbm [shape: f32[16,128], index: 7, kind: output, shape index: {}]
  %s8 = sld [smem:[#allocation0]]
  $region73: #{tpu_custom_call.1} parent=0
    _
  %s10 = ssub.s32 1, %s8
  %s11 = scalar_select 0, %s10, %s8
  $region1: #{tpu_custom_call.1} parent=0
    #allocation2 [shape = 'u8[8192]{0}', space=vmem, size = 0x2000, scoped, tag = 'input window, operand 0']
    #allocation3 [shape = 's32[2]{0}', space=sflag, size = 0x8, scoped, tag = 'scoped memory for tpu_custom_call.1']
    #allocation4 [shape = 's32[2]{0}', space=sflag, size = 0x8, scoped, tag = 'scoped memory for tpu_custom_call.1']
    #allocation5 [shape = 'u8[131072]{0}', space=vmem, size = 0x20000, scoped, tag = 'input window, operand 1, single buffered']
    #allocation6 [shape = 's32[1]{0}', space=sflag, size = 0x4, scoped, tag = 'scoped memory for tpu_custom_call.1']
    #allocation7 [shape = 'u8[131072]{0}', space=vmem, size = 0x20000, scoped, tag = 'input window, operand 3, single buffered']
    #allocation8 [shape = 'u8[8192]{0}', space=vmem, size = 0x2000, scoped, tag = 'output window, operand 0']
    %12 = vsyncpa [#allocation3], 0
    %s13 = scalar_lea.sflag [#allocation3], 1
    %14 = vsyncpa %s13, 0
    %15 = vsyncpa [#allocation6], 0
    %16 = vsyncpa [#allocation4], 0
    %s17 = scalar_lea.sflag [#allocation4], 1
    %18 = vsyncpa %s17, 0
    loop: start=0, step=1, limit=4
    $region2: #{tpu_custom_call.1} parent=1 // loop_pre_header
      _
    $region3: #{tpu_custom_call.1} parent=1 // loop_header
      %s20 = sphi 0, %s24
      %p21 = scmp.ge.s32.totalorder %s20, 4
      %s30 = sphi 0, %s32
      %s33 = sphi 0, %s30
      %s34 = sphi 0, %s33
      %s50 = sphi 0, %s34
      %s54 = sphi 0, %s54
      %s56 = sphi 0, %s54
      %s57 = sphi 0, %s56
      %s71 = sphi 0, %s57
      %s75 = sphi 0, %s75
      %s77 = sphi 0, %s75
      %s78 = sphi 0, %s77
      %s92 = sphi 0, %s78
      %s96 = sphi 0, %s96
      %s98 = sphi 0, %s96
      %s99 = sphi 0, %s98
      %s113 = sphi 0, %s99
      %s117 = sphi 0, %s117
      %s119 = sphi 0, %s117
      %s120 = sphi 0, %s119
      %s134 = sphi 0, %s120
      %s138 = sphi 0, %s138
      %s140 = sphi 0, %s138
      %s141 = sphi 0, %s140
      %s155 = sphi 0, %s141
      %s159 = sphi 0, %s159
      %s161 = sphi 0, %s159
      %s162 = sphi 0, %s161
      %s176 = sphi 0, %s162
      %s182 = sphi 0, %s184
      %s185 = sphi 0, %s182
      %s186 = sphi 0, %s185
      %s202 = sphi 0, %s186
    $region4: #{tpu_custom_call.1} parent=1 // loop_header_branch
      %23 = sbr.rel (%p21) target = $region8
    $region5: #{tpu_custom_call.1} parent=1 // loop_body
      %s25 = ssub.s32 %s20, 1
      %s26 = ssub.s32 %s20, 2
      %s27 = sadd.s32 %s20, 1
      %s28 = ssub.s32 %s20, %s27
      %p29 = scmp.eq.s32.totalorder %s28, 0
      %s31 = sadd.s32 %s30, 1
      %s32 = scalar_select %p29, %s30, %s31
      %p35 = pneg %p29
      %p36 = scmp.eq.s32.totalorder %s20, 1
      %p37 = por %p35, %p36
      %p38 = scmp.ne.s32.totalorder %s30, %s33
      %p39 = scmp.eq.s32.totalorder %s20, 0
      %p40 = por %p38, %p39
      %p41 = scmp.ne.s32.totalorder %s30, %s33
      %p42 = scmp.eq.s32.totalorder %s25, 1
      %p43 = por %p41, %p42
      %p44 = scmp.ne.s32.totalorder %s33, %s34
      %p45 = scmp.eq.s32.totalorder %s25, 0
      %p46 = por %p44, %p45
      %p47 = scmp.ne.s32.totalorder %s33, %s34
      %p48 = scmp.eq.s32.totalorder %s26, 1
      %p49 = por %p47, %p48
      %p51 = scmp.ne.s32.totalorder %s34, %s50
      %p52 = scmp.eq.s32.totalorder %s26, 0
      %p53 = por %p51, %p52
      %s55 = sadd.s32 %s54, 1
      %p58 = scmp.eq.s32.totalorder %s20, 1
      %p59 = scmp.ne.s32.totalorder %s54, %s56
      %p60 = scmp.eq.s32.totalorder %s20, 0
      %p61 = por %p59, %p60
      %p62 = scmp.ne.s32.totalorder %s54, %s56
      %p63 = scmp.eq.s32.totalorder %s25, 1
      %p64 = por %p62, %p63
      %p65 = scmp.ne.s32.totalorder %s56, %s57
      %p66 = scmp.eq.s32.totalorder %s25, 0
      %p67 = por %p65, %p66
      %p68 = scmp.ne.s32.totalorder %s56, %s57
      %p69 = scmp.eq.s32.totalorder %s26, 1
      %p70 = por %p68, %p69
      %p72 = scmp.ne.s32.totalorder %s57, %s71
      %p73 = scmp.eq.s32.totalorder %s26, 0
      %p74 = por %p72, %p73
      %s76 = sadd.s32 %s75, 1
      %p79 = scmp.eq.s32.totalorder %s20, 1
      %p80 = scmp.ne.s32.totalorder %s75, %s77
      %p81 = scmp.eq.s32.totalorder %s20, 0
      %p82 = por %p80, %p81
      %p83 = scmp.ne.s32.totalorder %s75, %s77
      %p84 = scmp.eq.s32.totalorder %s25, 1
      %p85 = por %p83, %p84
      %p86 = scmp.ne.s32.totalorder %s77, %s78
      %p87 = scmp.eq.s32.totalorder %s25, 0
      %p88 = por %p86, %p87
      %p89 = scmp.ne.s32.totalorder %s77, %s78
      %p90 = scmp.eq.s32.totalorder %s26, 1
      %p91 = por %p89, %p90
      %p93 = scmp.ne.s32.totalorder %s78, %s92
      %p94 = scmp.eq.s32.totalorder %s26, 0
      %p95 = por %p93, %p94
      %s97 = sadd.s32 %s96, 1
      %p100 = scmp.eq.s32.totalorder %s20, 1
      %p101 = scmp.ne.s32.totalorder %s96, %s98
      %p102 = scmp.eq.s32.totalorder %s20, 0
      %p103 = por %p101, %p102
      %p104 = scmp.ne.s32.totalorder %s96, %s98
      %p105 = scmp.eq.s32.totalorder %s25, 1
      %p106 = por %p104, %p105
      %p107 = scmp.ne.s32.totalorder %s98, %s99
      %p108 = scmp.eq.s32.totalorder %s25, 0
      %p109 = por %p107, %p108
      %p110 = scmp.ne.s32.totalorder %s98, %s99
      %p111 = scmp.eq.s32.totalorder %s26, 1
      %p112 = por %p110, %p111
      %p114 = scmp.ne.s32.totalorder %s99, %s113
      %p115 = scmp.eq.s32.totalorder %s26, 0
      %p116 = por %p114, %p115
      %s118 = sadd.s32 %s117, 1
      %p121 = scmp.eq.s32.totalorder %s20, 1
      %p122 = scmp.ne.s32.totalorder %s117, %s119
      %p123 = scmp.eq.s32.totalorder %s20, 0
      %p124 = por %p122, %p123
      %p125 = scmp.ne.s32.totalorder %s117, %s119
      %p126 = scmp.eq.s32.totalorder %s25, 1
      %p127 = por %p125, %p126
      %p128 = scmp.ne.s32.totalorder %s119, %s120
      %p129 = scmp.eq.s32.totalorder %s25, 0
      %p130 = por %p128, %p129
      %p131 = scmp.ne.s32.totalorder %s119, %s120
      %p132 = scmp.eq.s32.totalorder %s26, 1
      %p133 = por %p131, %p132
      %p135 = scmp.ne.s32.totalorder %s120, %s134
      %p136 = scmp.eq.s32.totalorder %s26, 0
      %p137 = por %p135, %p136
      %s139 = sadd.s32 %s138, 1
      %p142 = scmp.eq.s32.totalorder %s20, 1
      %p143 = scmp.ne.s32.totalorder %s138, %s140
      %p144 = scmp.eq.s32.totalorder %s20, 0
      %p145 = por %p143, %p144
      %p146 = scmp.ne.s32.totalorder %s138, %s140
      %p147 = scmp.eq.s32.totalorder %s25, 1
      %p148 = por %p146, %p147
      %p149 = scmp.ne.s32.totalorder %s140, %s141
      %p150 = scmp.eq.s32.totalorder %s25, 0
      %p151 = por %p149, %p150
      %p152 = scmp.ne.s32.totalorder %s140, %s141
      %p153 = scmp.eq.s32.totalorder %s26, 1
      %p154 = por %p152, %p153
      %p156 = scmp.ne.s32.totalorder %s141, %s155
      %p157 = scmp.eq.s32.totalorder %s26, 0
      %p158 = por %p156, %p157
      %s160 = sadd.s32 %s159, 1
      %p163 = scmp.eq.s32.totalorder %s20, 1
      %p164 = scmp.ne.s32.totalorder %s159, %s161
      %p165 = scmp.eq.s32.totalorder %s20, 0
      %p166 = por %p164, %p165
      %p167 = scmp.ne.s32.totalorder %s159, %s161
      %p168 = scmp.eq.s32.totalorder %s25, 1
      %p169 = por %p167, %p168
      %p170 = scmp.ne.s32.totalorder %s161, %s162
      %p171 = scmp.eq.s32.totalorder %s25, 0
      %p172 = por %p170, %p171
      %p173 = scmp.ne.s32.totalorder %s161, %s162
      %p174 = scmp.eq.s32.totalorder %s26, 1
      %p175 = por %p173, %p174
      %p177 = scmp.ne.s32.totalorder %s162, %s176
      %p178 = scmp.eq.s32.totalorder %s26, 0
      %p179 = por %p177, %p178
      %s180 = ssub.s32 %s20, %s27
      %p181 = scmp.eq.s32.totalorder %s180, 0
      %s183 = sadd.s32 %s182, 1
      %s184 = scalar_select %p181, %s182, %s183
      %p187 = pneg %p181
      %p188 = scmp.eq.s32.totalorder %s20, 1
      %p189 = por %p187, %p188
      %p190 = scmp.ne.s32.totalorder %s182, %s185
      %p191 = scmp.eq.s32.totalorder %s20, 0
      %p192 = por %p190, %p191
      %p193 = scmp.ne.s32.totalorder %s182, %s185
      %p194 = scmp.eq.s32.totalorder %s25, 1
      %p195 = por %p193, %p194
      %p196 = scmp.ne.s32.totalorder %s185, %s186
      %p197 = scmp.eq.s32.totalorder %s25, 0
      %p198 = por %p196, %p197
      %p199 = scmp.ne.s32.totalorder %s185, %s186
      %p200 = scmp.eq.s32.totalorder %s26, 1
      %p201 = por %p199, %p200
      %p203 = scmp.ne.s32.totalorder %s186, %s202
      %p204 = scmp.eq.s32.totalorder %s26, 0
      %p205 = por %p203, %p204
      %p206 = scmp.le.s32.totalorder 1, %s20
      %p207 = scmp.lt.s32.totalorder %s20, 3
      %p208 = pnand %p206, %p207
      %p209 = pneg %p208
      // Predicated region
      $region9: #{tpu_custom_call.1} parent=5 // pred_check
        _
      $region10: #{tpu_custom_call.1} parent=5 // pred_check_branch
        %211 = sbr.rel (%p208) target = $region12
      $region11: #{tpu_custom_call.1} parent=5 // pred_region
        %s212 = ssub.s32 %s20, 1
        // Predicated region
        $region13: #{tpu_custom_call.1} parent=11 // pred_check
          %p213 = pneg %p67
        $region14: #{tpu_custom_call.1} parent=11 // pred_check_branch
          %215 = sbr.rel (%p213) target = $region16
        $region15: #{tpu_custom_call.1} parent=11 // pred_region
          %s217 = ssub.s32 4096, 4096
          %218 = vsyncadd [#allocation6], %s217
          %s219 = sshll.u32 [#allocation5], 4
          %s220 = int_to_ptr.vmem [resolvable:$true] %s219
          %225 = dma.hbm_to_vmem [thread:$0]  %s1, 4096, %s220, [#allocation6], 256, 256, 16
        $region16: #{tpu_custom_call.1} parent=11 // pred_fallthru
          _
        // Predicated region
        $region17: #{tpu_custom_call.1} parent=11 // pred_check
          %p226 = pneg %p88
        $region18: #{tpu_custom_call.1} parent=11 // pred_check_branch
          %228 = sbr.rel (%p226) target = $region20
        $region19: #{tpu_custom_call.1} parent=11 // pred_region
          _
        $region20: #{tpu_custom_call.1} parent=11 // pred_fallthru
          _
        // Predicated region
        $region21: #{tpu_custom_call.1} parent=11 // pred_check
          %p229 = pneg %p109
        $region22: #{tpu_custom_call.1} parent=11 // pred_check_branch
          %231 = sbr.rel (%p229) target = $region24
        $region23: #{tpu_custom_call.1} parent=11 // pred_region
          %s233 = ssub.s32 4096, 4096
          %234 = vsyncadd [#allocation6], %s233
          %s235 = sshll.u32 [#allocation7], 4
          %s236 = int_to_ptr.vmem [resolvable:$true] %s235
          %241 = dma.hbm_to_vmem [thread:$0]  %s3, 4096, %s236, [#allocation6], 64, 64, 4
        $region24: #{tpu_custom_call.1} parent=11 // pred_fallthru
          _
        // Predicated region
        $region25: #{tpu_custom_call.1} parent=11 // pred_check
          %p242 = pneg %p130
        $region26: #{tpu_custom_call.1} parent=11 // pred_check_branch
          %244 = sbr.rel (%p242) target = $region28
        $region27: #{tpu_custom_call.1} parent=11 // pred_region
          _
        $region28: #{tpu_custom_call.1} parent=11 // pred_fallthru
          _
        // Predicated region
        $region29: #{tpu_custom_call.1} parent=11 // pred_check
          %p245 = pneg %p151
        $region30: #{tpu_custom_call.1} parent=11 // pred_check_branch
          %247 = sbr.rel (%p245) target = $region32
        $region31: #{tpu_custom_call.1} parent=11 // pred_region
          _
        $region32: #{tpu_custom_call.1} parent=11 // pred_fallthru
          _
        // Predicated region
        $region33: #{tpu_custom_call.1} parent=11 // pred_check
          %p248 = pneg %p172
        $region34: #{tpu_custom_call.1} parent=11 // pred_check_branch
          %250 = sbr.rel (%p248) target = $region36
        $region35: #{tpu_custom_call.1} parent=11 // pred_region
          _
        $region36: #{tpu_custom_call.1} parent=11 // pred_fallthru
          _
      $region12: #{tpu_custom_call.1} parent=5 // pred_fallthru
        _
      %p251 = scmp.lt.s32.totalorder %s20, 2
      // Predicated region
      $region37: #{tpu_custom_call.1} parent=5 // pred_check
        %p252 = pneg %p251
      $region38: #{tpu_custom_call.1} parent=5 // pred_check_branch
        %254 = sbr.rel (%p252) target = $region40
      $region39: #{tpu_custom_call.1} parent=5 // pred_region
        // Predicated region
        $region41: #{tpu_custom_call.1} parent=39 // pred_check
          %p255 = pneg %p40
        $region42: #{tpu_custom_call.1} parent=39 // pred_check_branch
          %257 = sbr.rel (%p255) target = $region44
        $region43: #{tpu_custom_call.1} parent=39 // pred_region
          %s258 = sand.u32 %s30, 1
          %s259 = scalar_lea.sflag [#allocation3], %s258
          %s260 = sand.u32 %s30, 1
          %s261 = smul.addr %s260, 8
          %s262 = scalar_lea.vmem [#allocation2], %s261
          %s264 = ssub.s32 128, 128
          %265 = vsyncadd %s259, %s264
          %s266 = smul.addr %s20, 128
          %s267 = scalar_lea.hbm %s0, %s266
          %s269 = sshll.u32 %s262, 4
          %s270 = int_to_ptr.vmem [resolvable:$true] %s269
          %272 = dma.hbm_to_vmem [thread:$0]  %s267, 128, %s270, %s259
        $region44: #{tpu_custom_call.1} parent=39 // pred_fallthru
          _
      $region40: #{tpu_custom_call.1} parent=5 // pred_fallthru
        _
      %p273 = scmp.le.s32.totalorder 1, %s20
      %p274 = scmp.lt.s32.totalorder %s20, 3
      %p275 = pnand %p273, %p274
      %p276 = pneg %p275
      // Predicated region
      $region45: #{tpu_custom_call.1} parent=5 // pred_check
        _
      $region46: #{tpu_custom_call.1} parent=5 // pred_check_branch
        %278 = sbr.rel (%p275) target = $region48
      $region47: #{tpu_custom_call.1} parent=5 // pred_region
        %s279 = ssub.s32 %s20, 1
        %s280 = sand.u32 %s33, 1
        %s281 = scalar_lea.sflag [#allocation3], %s280
        %s282 = sand.u32 %s33, 1
        %s283 = smul.addr %s282, 8
        %s284 = scalar_lea.vmem [#allocation2], %s283
        // Predicated region
        $region49: #{tpu_custom_call.1} parent=47 // pred_check
          %p285 = pneg %p46
        $region50: #{tpu_custom_call.1} parent=47 // pred_check_branch
          %287 = sbr.rel (%p285) target = $region52
        $region51: #{tpu_custom_call.1} parent=47 // pred_region
          %288 = dma.done %s281, 128
        $region52: #{tpu_custom_call.1} parent=47 // pred_fallthru
          _
        // Predicated region
        $region53: #{tpu_custom_call.1} parent=47 // pred_check
          %p289 = pneg %p67
        $region54: #{tpu_custom_call.1} parent=47 // pred_check_branch
          %291 = sbr.rel (%p289) target = $region56
        $region55: #{tpu_custom_call.1} parent=47 // pred_region
          %292 = dma.done [#allocation6], 4096
        $region56: #{tpu_custom_call.1} parent=47 // pred_fallthru
          _
        // Predicated region
        $region57: #{tpu_custom_call.1} parent=47 // pred_check
          %p293 = pneg %p109
        $region58: #{tpu_custom_call.1} parent=47 // pred_check_branch
          %295 = sbr.rel (%p293) target = $region60
        $region59: #{tpu_custom_call.1} parent=47 // pred_region
          %296 = dma.done [#allocation6], 4096
        $region60: #{tpu_custom_call.1} parent=47 // pred_fallthru
          _
        %s297 = sand.u32 %s33, 1
        %s298 = scalar_lea.sflag [#allocation3], %s297
        %s299 = sand.u32 %s33, 1
        %s300 = smul.addr %s299, 8
        %s301 = scalar_lea.vmem [#allocation2], %s300
        %p302 = pneg %p46
        %p303 = pneg %p43
        %p304 = pneg %p67
        %p305 = pneg %p64
        %p306 = pneg %p88
        %p307 = pneg %p85
        %p308 = pneg %p109
        %p309 = pneg %p106
        %p310 = pneg %p130
        %p311 = pneg %p127
        %p312 = pneg %p151
        %p313 = pneg %p148
        %p314 = pneg %p172
        %p315 = pneg %p169
        %p316 = pneg %p198
        %p317 = pneg %p195
        %s318 = sand.u32 %s185, 1
        %s319 = scalar_lea.sflag [#allocation4], %s318
        %s320 = sand.u32 %s185, 1
        %s321 = smul.addr %s320, 8
        %s322 = scalar_lea.vmem [#allocation8], %s321
        %v324 = vld [vmem:[%s2] sm:$0xf]
        %v325 = vld [vmem:[%s4] sm:$0x1]
        %v326 = vld [vmem:[%s5] sm:$0x1]
        %v327 = vld [vmem:[%s6] sm:$0x1]
        %v328 = vld [vmem:[%s284] sm:$0xff]
        %v329 = vpack.c.bf16 %v328, %v328
        %v330 = vld [vmem:[#allocation5] sm:$0xff]
        %v331 = vld [vmem:[#allocation5 + $0x8] sm:$0xff]
        %v332 = vld [vmem:[#allocation5 + $0x10] sm:$0xff]
        %v333 = vld [vmem:[#allocation5 + $0x18] sm:$0xff]
        %v334 = vld [vmem:[#allocation5 + $0x20] sm:$0xff]
        %v335 = vld [vmem:[#allocation5 + $0x28] sm:$0xff]
        %v336 = vld [vmem:[#allocation5 + $0x30] sm:$0xff]
        %v337 = vld [vmem:[#allocation5 + $0x38] sm:$0xff]
        %v338 = vld [vmem:[#allocation5 + $0x40] sm:$0xff]
        %v339 = vld [vmem:[#allocation5 + $0x48] sm:$0xff]
        %v340 = vld [vmem:[#allocation5 + $0x50] sm:$0xff]
        %v341 = vld [vmem:[#allocation5 + $0x58] sm:$0xff]
        %v342 = vld [vmem:[#allocation5 + $0x60] sm:$0xff]
        %v343 = vld [vmem:[#allocation5 + $0x68] sm:$0xff]
        %v344 = vld [vmem:[#allocation5 + $0x70] sm:$0xff]
        %v345 = vld [vmem:[#allocation5 + $0x78] sm:$0xff]
        %v346 = vld [vmem:[#allocation5 + $0x80] sm:$0xff]
        %v347 = vld [vmem:[#allocation5 + $0x88] sm:$0xff]
        %v348 = vld [vmem:[#allocation5 + $0x90] sm:$0xff]
        %v349 = vld [vmem:[#allocation5 + $0x98] sm:$0xff]
        %v350 = vld [vmem:[#allocation5 + $0xa0] sm:$0xff]
        %v351 = vld [vmem:[#allocation5 + $0xa8] sm:$0xff]
        %v352 = vld [vmem:[#allocation5 + $0xb0] sm:$0xff]
        %v353 = vld [vmem:[#allocation5 + $0xb8] sm:$0xff]
        %v354 = vld [vmem:[#allocation5 + $0xc0] sm:$0xff]
        %v355 = vld [vmem:[#allocation5 + $0xc8] sm:$0xff]
        %v356 = vld [vmem:[#allocation5 + $0xd0] sm:$0xff]
        %v357 = vld [vmem:[#allocation5 + $0xd8] sm:$0xff]
        %v358 = vld [vmem:[#allocation5 + $0xe0] sm:$0xff]
        %v359 = vld [vmem:[#allocation5 + $0xe8] sm:$0xff]
        %v360 = vld [vmem:[#allocation5 + $0xf0] sm:$0xff]
        %v361 = vld [vmem:[#allocation5 + $0xf8] sm:$0xff]
        %v363 = vlaneseq
        %v364 = vshrl.u32 %v363, 7
        %v365 = vsub.s32 0, %v364
        %v366 = vrot.slane %v324, %v365
        %v367 = vlaneseq
        %v368 = vshrl.u32 %v367, 7
        %v369 = vsub.s32 1, %v368
        %v370 = vrot.slane %v324, %v369
        %v371 = vlaneseq
        %v372 = vshrl.u32 %v371, 7
        %v373 = vsub.s32 2, %v372
        %v374 = vrot.slane %v324, %v373
        %v375 = vlaneseq
        %v376 = vshrl.u32 %v375, 7
        %v377 = vsub.s32 3, %v376
        %v378 = vrot.slane %v324, %v377
        %v415 = vunpack.c.l.b16 %v330
        %v416 = vunpack.c.h.b16 %v330
        %v417 = vunpack.c.l.b16 %v331
        %v418 = vunpack.c.h.b16 %v331
        %v419 = vunpack.c.l.b16 %v332
        %v420 = vunpack.c.h.b16 %v332
        %v421 = vunpack.c.l.b16 %v333
        %v422 = vunpack.c.h.b16 %v333
        %v423 = vunpack.c.l.b16 %v334
        %v424 = vunpack.c.h.b16 %v334
        %v425 = vunpack.c.l.b16 %v335
        %v426 = vunpack.c.h.b16 %v335
        %v427 = vunpack.c.l.b16 %v336
        %v428 = vunpack.c.h.b16 %v336
        %v429 = vunpack.c.l.b16 %v337
        %v430 = vunpack.c.h.b16 %v337
        %v431 = vunpack.c.l.b16 %v338
        %v432 = vunpack.c.h.b16 %v338
        %v433 = vunpack.c.l.b16 %v339
        %v434 = vunpack.c.h.b16 %v339
        %v435 = vunpack.c.l.b16 %v340
        %v436 = vunpack.c.h.b16 %v340
        %v437 = vunpack.c.l.b16 %v341
        %v438 = vunpack.c.h.b16 %v341
        %v439 = vunpack.c.l.b16 %v342
        %v440 = vunpack.c.h.b16 %v342
        %v441 = vunpack.c.l.b16 %v343
        %v442 = vunpack.c.h.b16 %v343
        %v443 = vunpack.c.l.b16 %v344
        %v444 = vunpack.c.h.b16 %v344
        %v445 = vunpack.c.l.b16 %v345
        %v446 = vunpack.c.h.b16 %v345
        %v447 = vunpack.c.l.b16 %v346
        %v448 = vunpack.c.h.b16 %v346
        %v449 = vunpack.c.l.b16 %v347
        %v450 = vunpack.c.h.b16 %v347
        %v451 = vunpack.c.l.b16 %v348
        %v452 = vunpack.c.h.b16 %v348
        %v453 = vunpack.c.l.b16 %v349
        %v454 = vunpack.c.h.b16 %v349
        %v455 = vunpack.c.l.b16 %v350
        %v456 = vunpack.c.h.b16 %v350
        %v457 = vunpack.c.l.b16 %v351
        %v458 = vunpack.c.h.b16 %v351
        %v459 = vunpack.c.l.b16 %v352
        %v460 = vunpack.c.h.b16 %v352
        %v461 = vunpack.c.l.b16 %v353
        %v462 = vunpack.c.h.b16 %v353
        %v463 = vunpack.c.l.b16 %v354
        %v464 = vunpack.c.h.b16 %v354
        %v465 = vunpack.c.l.b16 %v355
        %v466 = vunpack.c.h.b16 %v355
        %v467 = vunpack.c.l.b16 %v356
        %v468 = vunpack.c.h.b16 %v356
        %v469 = vunpack.c.l.b16 %v357
        %v470 = vunpack.c.h.b16 %v357
        %v471 = vunpack.c.l.b16 %v358
        %v472 = vunpack.c.h.b16 %v358
        %v473 = vunpack.c.l.b16 %v359
        %v474 = vunpack.c.h.b16 %v359
        %v475 = vunpack.c.l.b16 %v360
        %v476 = vunpack.c.h.b16 %v360
        %v477 = vunpack.c.l.b16 %v361
        %v478 = vunpack.c.h.b16 %v361
        %v479 = vpack.c.b16 %v419, %v415
        %v480 = vpack.c.b16 %v420, %v416
        %v481 = vpack.c.b16 %v421, %v417
        %v482 = vpack.c.b16 %v422, %v418
        %v483 = vpack.c.b16 %v427, %v423
        %v484 = vpack.c.b16 %v428, %v424
        %v485 = vpack.c.b16 %v429, %v425
        %v486 = vpack.c.b16 %v430, %v426
        %v487 = vpack.c.b16 %v435, %v431
        %v488 = vpack.c.b16 %v436, %v432
        %v489 = vpack.c.b16 %v437, %v433
        %v490 = vpack.c.b16 %v438, %v434
        %v491 = vpack.c.b16 %v443, %v439
        %v492 = vpack.c.b16 %v444, %v440
        %v493 = vpack.c.b16 %v445, %v441
        %v494 = vpack.c.b16 %v446, %v442
        %v495 = vpack.c.b16 %v451, %v447
        %v496 = vpack.c.b16 %v452, %v448
        %v497 = vpack.c.b16 %v453, %v449
        %v498 = vpack.c.b16 %v454, %v450
        %v499 = vpack.c.b16 %v459, %v455
        %v500 = vpack.c.b16 %v460, %v456
        %v501 = vpack.c.b16 %v461, %v457
        %v502 = vpack.c.b16 %v462, %v458
        %v503 = vpack.c.b16 %v467, %v463
        %v504 = vpack.c.b16 %v468, %v464
        %v505 = vpack.c.b16 %v469, %v465
        %v506 = vpack.c.b16 %v470, %v466
        %v507 = vpack.c.b16 %v475, %v471
        %v508 = vpack.c.b16 %v476, %v472
        %v509 = vpack.c.b16 %v477, %v473
        %v510 = vpack.c.b16 %v478, %v474
        %543 = vmatprep.subr.bf16.mxu0 %v480
        %544 = vmatpush1.bf16.msra.mxu0 %v479
        %545 = vmatprep.subr.bf16.mxu0 %v484
        %546 = vmatpush1.bf16.msra.mxu0 %v483
        %547 = vmatprep.subr.bf16.mxu0 %v488
        %548 = vmatpush1.bf16.msra.mxu0 %v487
        %549 = vmatprep.subr.bf16.mxu0 %v492
        %550 = vmatpush1.bf16.msra.mxu0 %v491
        %551 = vmatprep.subr.bf16.mxu0 %v496
        %552 = vmatpush1.bf16.msra.mxu0 %v495
        %553 = vmatprep.subr.bf16.mxu0 %v500
        %554 = vmatpush1.bf16.msra.mxu0 %v499
        %555 = vmatprep.subr.bf16.mxu0 %v504
        %556 = vmatpush1.bf16.msra.mxu0 %v503
        %557 = vmatprep.subr.bf16.mxu0 %v508
        %558 = vmatpush1.bf16.msra.mxu0 %v507
        %559 = vmatprep.subr.bf16.mxu0 0
        %560 = vmatpush1.bf16.msra.mxu0 0
        %561 = vmatprep.subr.bf16.mxu0 0
        %562 = vmatpush1.bf16.msra.mxu0 0
        %563 = vmatprep.subr.bf16.mxu0 0
        %564 = vmatpush1.bf16.msra.mxu0 0
        %565 = vmatprep.subr.bf16.mxu0 0
        %566 = vmatpush1.bf16.msra.mxu0 0
        %567 = vmatprep.subr.bf16.mxu0 0
        %568 = vmatpush1.bf16.msra.mxu0 0
        %569 = vmatprep.subr.bf16.mxu0 0
        %570 = vmatpush1.bf16.msra.mxu0 0
        %571 = vmatprep.subr.bf16.mxu0 0
        %572 = vmatpush1.bf16.msra.mxu0 0
        %573 = vmatprep.subr.bf16.mxu0 0
        %574 = vmatpush1.bf16.msra.mxu0 0
        %575 = vmatprep.mubr.bf16.mxu0 0
        %576 = vmatmul.mubr.bf16.gmra.mrb[0].mxu0 %v329
        %v577 = vpop.f32.mrb[0].mxu0
        %v578 = vadd.f32 %v366, %v577
        %v579 = vpop.f32.mrb[0].mxu0
        %v580 = vadd.f32 %v370, %v579
        %v581 = vpop.f32.mrb[0].mxu0
        %v582 = vpop.f32.mrb[0].mxu0
        %583 = vdwg.mxu0
        %584 = vmatprep.subr.bf16.mxu0 %v482
        %585 = vmatpush1.bf16.msra.mxu0 %v481
        %586 = vmatprep.subr.bf16.mxu0 %v486
        %587 = vmatpush1.bf16.msra.mxu0 %v485
        %588 = vmatprep.subr.bf16.mxu0 %v490
        %589 = vmatpush1.bf16.msra.mxu0 %v489
        %590 = vmatprep.subr.bf16.mxu0 %v494
        %591 = vmatpush1.bf16.msra.mxu0 %v493
        %592 = vmatprep.subr.bf16.mxu0 %v498
        %593 = vmatpush1.bf16.msra.mxu0 %v497
        %594 = vmatprep.subr.bf16.mxu0 %v502
        %595 = vmatpush1.bf16.msra.mxu0 %v501
        %596 = vmatprep.subr.bf16.mxu0 %v506
        %597 = vmatpush1.bf16.msra.mxu0 %v505
        %598 = vmatprep.subr.bf16.mxu0 %v510
        %599 = vmatpush1.bf16.msra.mxu0 %v509
        %600 = vmatprep.subr.bf16.mxu0 0
        %601 = vmatpush1.bf16.msra.mxu0 0
        %602 = vmatprep.subr.bf16.mxu0 0
        %603 = vmatpush1.bf16.msra.mxu0 0
        %604 = vmatprep.subr.bf16.mxu0 0
        %605 = vmatpush1.bf16.msra.mxu0 0
        %606 = vmatprep.subr.bf16.mxu0 0
        %607 = vmatpush1.bf16.msra.mxu0 0
        %608 = vmatprep.subr.bf16.mxu0 0
        %609 = vmatpush1.bf16.msra.mxu0 0
        %610 = vmatprep.subr.bf16.mxu0 0
        %611 = vmatpush1.bf16.msra.mxu0 0
        %612 = vmatprep.subr.bf16.mxu0 0
        %613 = vmatpush1.bf16.msra.mxu0 0
        %614 = vmatprep.subr.bf16.mxu0 0
        %615 = vmatpush1.bf16.msra.mxu0 0
        %616 = vmatprep.mubr.bf16.mxu0 0
        %617 = vmatmul.mubr.bf16.gmra.mrb[0].mxu0 %v329
        %v618 = vpop.f32.mrb[0].mxu0
        %v619 = vadd.f32 %v374, %v618
        %v620 = vpop.f32.mrb[0].mxu0
        %v621 = vadd.f32 %v378, %v620
        %v622 = vpop.f32.mrb[0].mxu0
        %v623 = vpop.f32.mrb[0].mxu0
        %624 = vdwg.mxu0
        %v625 = vmax.f32 %v578, 0.0
        %v626 = vmax.f32 %v580, 0.0
        %v627 = vmax.f32 %v619, 0.0
        %v628 = vmax.f32 %v621, 0.0
        %v629 = vpack.c.bf16 %v625, %v625
        %v630 = vpack.c.bf16 %v626, %v626
        %v631 = vpack.c.bf16 %v627, %v627
        %v632 = vpack.c.bf16 %v628, %v628
        %v633 = vld [vmem:[#allocation7] sm:$0xf]
        %v634 = vld [vmem:[#allocation7 + $0x4] sm:$0xf]
        %v635 = vld [vmem:[#allocation7 + $0x8] sm:$0xf]
        %v636 = vld [vmem:[#allocation7 + $0xc] sm:$0xf]
        %v637 = vld [vmem:[#allocation7 + $0x10] sm:$0xf]
        %v638 = vld [vmem:[#allocation7 + $0x14] sm:$0xf]
        %v639 = vld [vmem:[#allocation7 + $0x18] sm:$0xf]
        %v640 = vld [vmem:[#allocation7 + $0x1c] sm:$0xf]
        %v641 = vld [vmem:[#allocation7 + $0x20] sm:$0xf]
        %v642 = vld [vmem:[#allocation7 + $0x24] sm:$0xf]
        %v643 = vld [vmem:[#allocation7 + $0x28] sm:$0xf]
        %v644 = vld [vmem:[#allocation7 + $0x2c] sm:$0xf]
        %v645 = vld [vmem:[#allocation7 + $0x30] sm:$0xf]
        %v646 = vld [vmem:[#allocation7 + $0x34] sm:$0xf]
        %v647 = vld [vmem:[#allocation7 + $0x38] sm:$0xf]
        %v648 = vld [vmem:[#allocation7 + $0x3c] sm:$0xf]
        %v649 = vld [vmem:[#allocation7 + $0x40] sm:$0xf]
        %v650 = vld [vmem:[#allocation7 + $0x44] sm:$0xf]
        %v651 = vld [vmem:[#allocation7 + $0x48] sm:$0xf]
        %v652 = vld [vmem:[#allocation7 + $0x4c] sm:$0xf]
        %v653 = vld [vmem:[#allocation7 + $0x50] sm:$0xf]
        %v654 = vld [vmem:[#allocation7 + $0x54] sm:$0xf]
        %v655 = vld [vmem:[#allocation7 + $0x58] sm:$0xf]
        %v656 = vld [vmem:[#allocation7 + $0x5c] sm:$0xf]
        %v657 = vld [vmem:[#allocation7 + $0x60] sm:$0xf]
        %v658 = vld [vmem:[#allocation7 + $0x64] sm:$0xf]
        %v659 = vld [vmem:[#allocation7 + $0x68] sm:$0xf]
        %v660 = vld [vmem:[#allocation7 + $0x6c] sm:$0xf]
        %v661 = vld [vmem:[#allocation7 + $0x70] sm:$0xf]
        %v662 = vld [vmem:[#allocation7 + $0x74] sm:$0xf]
        %v663 = vld [vmem:[#allocation7 + $0x78] sm:$0xf]
        %v664 = vld [vmem:[#allocation7 + $0x7c] sm:$0xf]
        %v665 = vld [vmem:[#allocation7 + $0x80] sm:$0xf]
        %v666 = vld [vmem:[#allocation7 + $0x84] sm:$0xf]
        %v667 = vld [vmem:[#allocation7 + $0x88] sm:$0xf]
        %v668 = vld [vmem:[#allocation7 + $0x8c] sm:$0xf]
        %v669 = vld [vmem:[#allocation7 + $0x90] sm:$0xf]
        %v670 = vld [vmem:[#allocation7 + $0x94] sm:$0xf]
        %v671 = vld [vmem:[#allocation7 + $0x98] sm:$0xf]
        %v672 = vld [vmem:[#allocation7 + $0x9c] sm:$0xf]
        %v673 = vld [vmem:[#allocation7 + $0xa0] sm:$0xf]
        %v674 = vld [vmem:[#allocation7 + $0xa4] sm:$0xf]
        %v675 = vld [vmem:[#allocation7 + $0xa8] sm:$0xf]
        %v676 = vld [vmem:[#allocation7 + $0xac] sm:$0xf]
        %v677 = vld [vmem:[#allocation7 + $0xb0] sm:$0xf]
        %v678 = vld [vmem:[#allocation7 + $0xb4] sm:$0xf]
        %v679 = vld [vmem:[#allocation7 + $0xb8] sm:$0xf]
        %v680 = vld [vmem:[#allocation7 + $0xbc] sm:$0xf]
        %v681 = vld [vmem:[#allocation7 + $0xc0] sm:$0xf]
        %v682 = vld [vmem:[#allocation7 + $0xc4] sm:$0xf]
        %v683 = vld [vmem:[#allocation7 + $0xc8] sm:$0xf]
        %v684 = vld [vmem:[#allocation7 + $0xcc] sm:$0xf]
        %v685 = vld [vmem:[#allocation7 + $0xd0] sm:$0xf]
        %v686 = vld [vmem:[#allocation7 + $0xd4] sm:$0xf]
        %v687 = vld [vmem:[#allocation7 + $0xd8] sm:$0xf]
        %v688 = vld [vmem:[#allocation7 + $0xdc] sm:$0xf]
        %v689 = vld [vmem:[#allocation7 + $0xe0] sm:$0xf]
        %v690 = vld [vmem:[#allocation7 + $0xe4] sm:$0xf]
        %v691 = vld [vmem:[#allocation7 + $0xe8] sm:$0xf]
        %v692 = vld [vmem:[#allocation7 + $0xec] sm:$0xf]
        %v693 = vld [vmem:[#allocation7 + $0xf0] sm:$0xf]
        %v694 = vld [vmem:[#allocation7 + $0xf4] sm:$0xf]
        %v695 = vld [vmem:[#allocation7 + $0xf8] sm:$0xf]
        %v696 = vld [vmem:[#allocation7 + $0xfc] sm:$0xf]
        %v698 = vlaneseq
        %v699 = vshrl.u32 %v698, 7
        %v700 = vsub.s32 0, %v699
        %v701 = vrot.slane %v325, %v700
        %v767 = vunpack.c.l.b16 %v633
        %v768 = vunpack.c.l.b16 %v634
        %v769 = vunpack.c.l.b16 %v635
        %v770 = vunpack.c.l.b16 %v636
        %v771 = vunpack.c.l.b16 %v637
        %v772 = vunpack.c.l.b16 %v638
        %v773 = vunpack.c.l.b16 %v639
        %v774 = vunpack.c.l.b16 %v640
        %v775 = vunpack.c.l.b16 %v641
        %v776 = vunpack.c.l.b16 %v642
        %v777 = vunpack.c.l.b16 %v643
        %v778 = vunpack.c.l.b16 %v644
        %v779 = vunpack.c.l.b16 %v645
        %v780 = vunpack.c.l.b16 %v646
        %v781 = vunpack.c.l.b16 %v647
        %v782 = vunpack.c.l.b16 %v648
        %v783 = vunpack.c.l.b16 %v649
        %v784 = vunpack.c.l.b16 %v650
        %v785 = vunpack.c.l.b16 %v651
        %v786 = vunpack.c.l.b16 %v652
        %v787 = vunpack.c.l.b16 %v653
        %v788 = vunpack.c.l.b16 %v654
        %v789 = vunpack.c.l.b16 %v655
        %v790 = vunpack.c.l.b16 %v656
        %v791 = vunpack.c.l.b16 %v657
        %v792 = vunpack.c.l.b16 %v658
        %v793 = vunpack.c.l.b16 %v659
        %v794 = vunpack.c.l.b16 %v660
        %v795 = vunpack.c.l.b16 %v661
        %v796 = vunpack.c.l.b16 %v662
        %v797 = vunpack.c.l.b16 %v663
        %v798 = vunpack.c.l.b16 %v664
        %v799 = vunpack.c.l.b16 %v665
        %v800 = vunpack.c.l.b16 %v666
        %v801 = vunpack.c.l.b16 %v667
        %v802 = vunpack.c.l.b16 %v668
        %v803 = vunpack.c.l.b16 %v669
        %v804 = vunpack.c.l.b16 %v670
        %v805 = vunpack.c.l.b16 %v671
        %v806 = vunpack.c.l.b16 %v672
        %v807 = vunpack.c.l.b16 %v673
        %v808 = vunpack.c.l.b16 %v674
        %v809 = vunpack.c.l.b16 %v675
        %v810 = vunpack.c.l.b16 %v676
        %v811 = vunpack.c.l.b16 %v677
        %v812 = vunpack.c.l.b16 %v678
        %v813 = vunpack.c.l.b16 %v679
        %v814 = vunpack.c.l.b16 %v680
        %v815 = vunpack.c.l.b16 %v681
        %v816 = vunpack.c.l.b16 %v682
        %v817 = vunpack.c.l.b16 %v683
        %v818 = vunpack.c.l.b16 %v684
        %v819 = vunpack.c.l.b16 %v685
        %v820 = vunpack.c.l.b16 %v686
        %v821 = vunpack.c.l.b16 %v687
        %v822 = vunpack.c.l.b16 %v688
        %v823 = vunpack.c.l.b16 %v689
        %v824 = vunpack.c.l.b16 %v690
        %v825 = vunpack.c.l.b16 %v691
        %v826 = vunpack.c.l.b16 %v692
        %v827 = vunpack.c.l.b16 %v693
        %v828 = vunpack.c.l.b16 %v694
        %v829 = vunpack.c.l.b16 %v695
        %v830 = vunpack.c.l.b16 %v696
        %v831 = vpack.c.b16 %v768, %v767
        %v832 = vpack.c.b16 %v770, %v769
        %v833 = vpack.c.b16 %v772, %v771
        %v834 = vpack.c.b16 %v774, %v773
        %v835 = vpack.c.b16 %v776, %v775
        %v836 = vpack.c.b16 %v778, %v777
        %v837 = vpack.c.b16 %v780, %v779
        %v838 = vpack.c.b16 %v782, %v781
        %v839 = vpack.c.b16 %v784, %v783
        %v840 = vpack.c.b16 %v786, %v785
        %v841 = vpack.c.b16 %v788, %v787
        %v842 = vpack.c.b16 %v790, %v789
        %v843 = vpack.c.b16 %v792, %v791
        %v844 = vpack.c.b16 %v794, %v793
        %v845 = vpack.c.b16 %v796, %v795
        %v846 = vpack.c.b16 %v798, %v797
        %v847 = vpack.c.b16 %v800, %v799
        %v848 = vpack.c.b16 %v802, %v801
        %v849 = vpack.c.b16 %v804, %v803
        %v850 = vpack.c.b16 %v806, %v805
        %v851 = vpack.c.b16 %v808, %v807
        %v852 = vpack.c.b16 %v810, %v809
        %v853 = vpack.c.b16 %v812, %v811
        %v854 = vpack.c.b16 %v814, %v813
        %v855 = vpack.c.b16 %v816, %v815
        %v856 = vpack.c.b16 %v818, %v817
        %v857 = vpack.c.b16 %v820, %v819
        %v858 = vpack.c.b16 %v822, %v821
        %v859 = vpack.c.b16 %v824, %v823
        %v860 = vpack.c.b16 %v826, %v825
        %v861 = vpack.c.b16 %v828, %v827
        %v862 = vpack.c.b16 %v830, %v829
        %895 = vmatprep.subr.bf16.mxu0 0
        %896 = vmatpush1.bf16.msra.mxu0 %v831
        %897 = vmatprep.subr.bf16.mxu0 0
        %898 = vmatpush1.bf16.msra.mxu0 %v832
        %899 = vmatprep.subr.bf16.mxu0 0
        %900 = vmatpush1.bf16.msra.mxu0 %v833
        %901 = vmatprep.subr.bf16.mxu0 0
        %902 = vmatpush1.bf16.msra.mxu0 %v834
        %903 = vmatprep.subr.bf16.mxu0 0
        %904 = vmatpush1.bf16.msra.mxu0 %v835
        %905 = vmatprep.subr.bf16.mxu0 0
        %906 = vmatpush1.bf16.msra.mxu0 %v836
        %907 = vmatprep.subr.bf16.mxu0 0
        %908 = vmatpush1.bf16.msra.mxu0 %v837
        %909 = vmatprep.subr.bf16.mxu0 0
        %910 = vmatpush1.bf16.msra.mxu0 %v838
        %911 = vmatprep.subr.bf16.mxu0 0
        %912 = vmatpush1.bf16.msra.mxu0 %v839
        %913 = vmatprep.subr.bf16.mxu0 0
        %914 = vmatpush1.bf16.msra.mxu0 %v840
        %915 = vmatprep.subr.bf16.mxu0 0
        %916 = vmatpush1.bf16.msra.mxu0 %v841
        %917 = vmatprep.subr.bf16.mxu0 0
        %918 = vmatpush1.bf16.msra.mxu0 %v842
        %919 = vmatprep.subr.bf16.mxu0 0
        %920 = vmatpush1.bf16.msra.mxu0 %v843
        %921 = vmatprep.subr.bf16.mxu0 0
        %922 = vmatpush1.bf16.msra.mxu0 %v844
        %923 = vmatprep.subr.bf16.mxu0 0
        %924 = vmatpush1.bf16.msra.mxu0 %v845
        %925 = vmatprep.subr.bf16.mxu0 0
        %926 = vmatpush1.bf16.msra.mxu0 %v846
        %927 = vmatprep.mubr.bf16.mxu0 %v630
        %928 = vmatmul.mubr.bf16.gmra.mrb[0].mxu0 %v629
        %v929 = vpop.f32.mrb[0].mxu0
        %v930 = vadd.f32 %v701, %v929
        %v931 = vpop.f32.mrb[0].mxu0
        %v932 = vpop.f32.mrb[0].mxu0
        %v933 = vpop.f32.mrb[0].mxu0
        %934 = vdwg.mxu0
        %935 = vmatprep.subr.bf16.mxu0 0
        %936 = vmatpush1.bf16.msra.mxu0 %v847
        %937 = vmatprep.subr.bf16.mxu0 0
        %938 = vmatpush1.bf16.msra.mxu0 %v848
        %939 = vmatprep.subr.bf16.mxu0 0
        %940 = vmatpush1.bf16.msra.mxu0 %v849
        %941 = vmatprep.subr.bf16.mxu0 0
        %942 = vmatpush1.bf16.msra.mxu0 %v850
        %943 = vmatprep.subr.bf16.mxu0 0
        %944 = vmatpush1.bf16.msra.mxu0 %v851
        %945 = vmatprep.subr.bf16.mxu0 0
        %946 = vmatpush1.bf16.msra.mxu0 %v852
        %947 = vmatprep.subr.bf16.mxu0 0
        %948 = vmatpush1.bf16.msra.mxu0 %v853
        %949 = vmatprep.subr.bf16.mxu0 0
        %950 = vmatpush1.bf16.msra.mxu0 %v854
        %951 = vmatprep.subr.bf16.mxu0 0
        %952 = vmatpush1.bf16.msra.mxu0 %v855
        %953 = vmatprep.subr.bf16.mxu0 0
        %954 = vmatpush1.bf16.msra.mxu0 %v856
        %955 = vmatprep.subr.bf16.mxu0 0
        %956 = vmatpush1.bf16.msra.mxu0 %v857
        %957 = vmatprep.subr.bf16.mxu0 0
        %958 = vmatpush1.bf16.msra.mxu0 %v858
        %959 = vmatprep.subr.bf16.mxu0 0
        %960 = vmatpush1.bf16.msra.mxu0 %v859
        %961 = vmatprep.subr.bf16.mxu0 0
        %962 = vmatpush1.bf16.msra.mxu0 %v860
        %963 = vmatprep.subr.bf16.mxu0 0
        %964 = vmatpush1.bf16.msra.mxu0 %v861
        %965 = vmatprep.subr.bf16.mxu0 0
        %966 = vmatpush1.bf16.msra.mxu0 %v862
        %967 = vmatprep.mubr.bf16.mxu0 %v632
        %968 = vmatmul.mubr.bf16.gmra.mrb[0].mxu0 %v631
        %v969 = vpop.f32.mrb[0].mxu0
        %v970 = vadd.f32 %v930, %v969
        %v971 = vpop.f32.mrb[0].mxu0
        %v972 = vpop.f32.mrb[0].mxu0
        %v973 = vpop.f32.mrb[0].mxu0
        %974 = vdwg.mxu0
        %v975 = vadd.f32 %v328, %v970
        %976 = vadd.xlane.f32.xlu0 %v975
        %v977 = vpop.xlane.xlu0 %976
        %v978 = vrcp.pop 128.0
        %v979 = vmul.f32 %v977, %v978
        %v980 = vsub.f32 %v975, %v979
        %v981 = vmul.f32 %v980, %v980
        %982 = vadd.xlane.f32.xlu0 %v981
        %v983 = vpop.xlane.xlu0 %982
        %v984 = vmul.f32 %v983, %v978
        %v985 = vadd.f32 %v984, 1e-05
        %v986 = vrsqrt.pop %v985
        %v987 = vmul.f32 %v980, %v986
        %v989 = vlaneseq
        %v990 = vshrl.u32 %v989, 7
        %v991 = vsub.s32 0, %v990
        %v992 = vrot.slane %v326, %v991
        %v994 = vmul.f32 %v987, %v992
        %v996 = vlaneseq
        %v997 = vshrl.u32 %v996, 7
        %v998 = vsub.s32 0, %v997
        %v999 = vrot.slane %v327, %v998
        %v1001 = vadd.f32 %v994, %v999
        %1002 = vst [vmem:[%s322] sm:$0xff] %v1001
        %s1003 = sand.u32 %s185, 1
        %s1004 = scalar_lea.sflag [#allocation4], %s1003
        %s1005 = sand.u32 %s185, 1
        %s1006 = smul.addr %s1005, 8
        %s1007 = scalar_lea.vmem [#allocation8], %s1006
        // Predicated region
        $region61: #{tpu_custom_call.1} parent=47 // pred_check
          %p1008 = pneg %p195
        $region62: #{tpu_custom_call.1} parent=47 // pred_check_branch
          %1010 = sbr.rel (%p1008) target = $region64
        $region63: #{tpu_custom_call.1} parent=47 // pred_region
          %s1012 = ssub.s32 128, 128
          %1013 = vsyncadd %s1004, %s1012
          %s1014 = smul.addr %s25, 128
          %s1015 = scalar_lea.hbm %s7, %s1014
          %s1017 = sshll.u32 %s1007, 4
          %s1018 = int_to_ptr.vmem [resolvable:$true] %s1017
          %1020 = dma.vmem_to_hbm [thread:$0]  %s1018, 128, %s1015, %s1004
        $region64: #{tpu_custom_call.1} parent=47 // pred_fallthru
          _
      $region48: #{tpu_custom_call.1} parent=5 // pred_fallthru
        _
      %p1021 = scmp.le.s32.totalorder 2, %s20
      // Predicated region
      $region65: #{tpu_custom_call.1} parent=5 // pred_check
        %p1022 = pneg %p1021
      $region66: #{tpu_custom_call.1} parent=5 // pred_check_branch
        %1024 = sbr.rel (%p1022) target = $region68
      $region67: #{tpu_custom_call.1} parent=5 // pred_region
        %s1025 = ssub.s32 %s20, 2
        // Predicated region
        $region69: #{tpu_custom_call.1} parent=67 // pred_check
          %p1026 = pneg %p201
        $region70: #{tpu_custom_call.1} parent=67 // pred_check_branch
          %1028 = sbr.rel (%p1026) target = $region72
        $region71: #{tpu_custom_call.1} parent=67 // pred_region
          %s1029 = sand.u32 %s186, 1
          %s1030 = scalar_lea.sflag [#allocation4], %s1029
          %s1031 = sand.u32 %s186, 1
          %s1032 = smul.addr %s1031, 8
          %s1033 = scalar_lea.vmem [#allocation8], %s1032
          %1034 = dma.done %s1030, 128
        $region72: #{tpu_custom_call.1} parent=67 // pred_fallthru
          _
      $region68: #{tpu_custom_call.1} parent=5 // pred_fallthru
        _
    $region6: #{tpu_custom_call.1} parent=1 // loop_footer
      %s24 = sadd.s32 1, %s20
    $region7: #{tpu_custom_call.1} parent=1 // loop_footer_branch
      %19 = sbr.rel target = $region3
    $region8: #{tpu_custom_call.1} parent=1 // loop_exit
      _
    %1035 = vsyncpa [#allocation3], 1
    %s1036 = scalar_lea.sflag [#allocation3], 1
    %1037 = vsyncpa %s1036, 1
    %1038 = vsyncpa [#allocation6], 1
    %1039 = vsyncpa [#allocation4], 1
    %s1040 = scalar_lea.sflag [#allocation4], 1
    %1041 = vsyncpa %s1040, 1

</llo_original>
